<compile_context>
chip_gen: v5e
topology: v5e:2x2
jax: 0.10.0
libtpu: 0.0.40
codegen_flags: <defaults>
</compile_context>

<pallas_src>
import functools

import jax
import jax.numpy as jnp
from jax.experimental import pallas as pl
from jax.experimental.pallas import tpu as pltpu


def _gelu_tanh(x):
    # tanh-approximation GELU (matches the hand-rolled GPT-style GELU).
    # TODO(synk): PyTorch nn.GELU() defaults to the exact erf form; if the
    # reference GELU() class uses erf, outputs differ by ~1e-3.
    c = jnp.sqrt(jnp.asarray(2.0 / jnp.pi, x.dtype))
    return 0.5 * x * (1.0 + jnp.tanh(c * (x + 0.044715 * x * x * x)))


def _ffn_kernel(x_ref, w1_ref, b1_ref, w2_ref, b2_ref, o_ref, acc_ref, *,
                activation):
    j = pl.program_id(1)

    @pl.when(j == 0)
    def _():
        # Seed the accumulator with the broadcast output bias so the finalize
        # branch is a pure cast/store (lane-dense vst), saving one (tm, E) add.
        acc_ref[...] = jnp.broadcast_to(
            b2_ref[...].astype(jnp.float32), acc_ref.shape)

    # First linear on this hidden tile: (tm, E) @ (E, th) + (1, th) -> f32
    h = jnp.dot(x_ref[...], w1_ref[...], preferred_element_type=jnp.float32)
    h = h + b1_ref[...].astype(jnp.float32)

    if activation == "relu":
        h = jnp.maximum(h, 0.0)
    else:  # gelu — f32 VPU/EUP path on all generations
        h = _gelu_tanh(h)

    # Second linear partial sum: (tm, th) @ (th, E), accumulate in f32 scratch.
    acc_ref[...] += jnp.dot(h.astype(w2_ref.dtype), w2_ref[...],
                            preferred_element_type=jnp.float32)

    @pl.when(j == pl.num_programs(1) - 1)
    def _():
        o_ref[...] = acc_ref[...].astype(o_ref.dtype)


def _round_up(v, m):
    return -(-v // m) * m


def _device_budget():
    """Per-generation VMEM budget (bytes) and TensorCore count per chip."""
    try:
        kind = jax.devices()[0].device_kind.lower()
    except Exception:
        kind = ""
    if "v7" in kind:
        # 64 MiB physical VMEM per TC, 2 TCs/chip; keep Mosaic headroom.
        return kind, 52 * 1024 * 1024, 2
    # v5e/v5p/v6e: 128 MiB physical VMEM, single grid-visible core.
    return kind, 104 * 1024 * 1024, 1


def _vmem_need(tm, th, E, x_item, w_item, o_item):
    """Estimated VMEM footprint of one grid step (double-buffered tiles)."""
    return (2 * tm * E * x_item        # x row tile
            + 2 * E * th * w_item      # W1 column tile
            + 2 * th * E * w_item      # W2 row tile
            + 2 * th * 4               # b1 tile (f32)
            + 2 * E * 4                # b2 (f32)
            + 2 * tm * E * o_item      # output tile
            + tm * E * 4               # f32 accumulator scratch
            + 3 * tm * th * 4)         # h + activation/cast temporaries (f32)


def _pick_tiles(M, E, H, x_item, w_item, o_item, budget, n_cores):
    """Pick (tm, th).

    tm buys arithmetic intensity (W1/W2 are re-streamed from HBM once per row
    tile), so prefer the largest tm that fits the VMEM budget; th only needs
    to stay a multiple of 128/256 for MXU efficiency.  On multi-TC chips keep
    tm small enough that the 'parallel' row axis has >= n_cores tiles.
    """
    m_pad = _round_up(max(M, 1), 8)
    if n_cores <= 1:
        tm_cap = m_pad
    else:
        tm_cap = max(8, _round_up(-(-M // n_cores), 8))

    th_cands = [t for t in (1024, 512, 256, 128) if H % t == 0] or [H]
    tm_cands = [t for t in (1024, 768, 512, 384, 256, 128, 64, 32, 16, 8)
                if t <= tm_cap]
    if not tm_cands:
        tm_cands = [tm_cap]

    usable = int(budget * 0.9)
    for tm in tm_cands:
        for th in th_cands:
            if _vmem_need(tm, th, E, x_item, w_item, o_item) <= usable:
                return tm, th
    return tm_cands[-1], th_cands[-1]


def feed_forward(x, w1, b1, w2, b2, *, activation="relu", tm=None, th=None,
                 compute_dtype="auto"):
    """x: (B, S, E); w1: (E, H); b1: (H,); w2: (H, E); b2: (E,). H = 4*E.

    compute_dtype:
      "auto" (default): cast f32 x/W1/W2 to bf16 (native MXU dtype, halves
        streamed weight HBM bytes); accumulation and biases stay f32.
      None: keep input dtypes.  A jnp dtype: cast to that dtype.
    """
    if activation not in ("relu", "gelu"):
        raise ValueError("Unsupported activation function. Use 'relu' or 'gelu'.")

    B, S, E = x.shape
    H = w1.shape[1]
    M = B * S
    out_dtype = x.dtype

    if compute_dtype == "auto":
        compute_dtype = jnp.bfloat16 if x.dtype == jnp.float32 else None
    if compute_dtype is not None:
        x = x.astype(compute_dtype)
        w1 = w1.astype(compute_dtype)
        w2 = w2.astype(compute_dtype)

    x_item = jnp.dtype(x.dtype).itemsize
    w_item = jnp.dtype(w1.dtype).itemsize
    o_item = jnp.dtype(out_dtype).itemsize

    _, vmem_cap, n_cores = _device_budget()
    auto_tm, auto_th = _pick_tiles(M, E, H, x_item, w_item, o_item,
                                   vmem_cap, n_cores)
    if tm is None:
        tm = auto_tm
    if th is None:
        th = auto_th

    # Pad the row count up to a multiple of the row tile (no divisibility assert).
    n_row_tiles = pl.cdiv(M, tm)
    M_pad = n_row_tiles * tm
    x2d = x.reshape(M, E)
    if M_pad != M:
        x2d = jnp.pad(x2d, ((0, M_pad - M), (0, 0)))

    b1_2d = b1.reshape(1, H).astype(jnp.float32)
    b2_2d = b2.reshape(1, E).astype(jnp.float32)

    n_h_tiles = pl.cdiv(H, th)
    grid = (n_row_tiles, n_h_tiles)

    kernel = functools.partial(_ffn_kernel, activation=activation)

    vmem_need = _vmem_need(tm, th, E, x_item, w_item, o_item)
    vmem_limit = int(min(max(int(vmem_need * 1.2), 32 * 1024 * 1024), vmem_cap))

    # Advisory cost for XLA's scheduler: weights are re-streamed once per row tile.
    cost = pl.CostEstimate(
        flops=4 * M_pad * E * H,
        transcendentals=(M_pad * H if activation == "gelu" else 0),
        bytes_accessed=int(x2d.size * x_item
                           + n_row_tiles * (w1.size + w2.size) * w_item
                           + b1.size * 4 + b2.size * 4
                           + M_pad * E * o_item),
    )

    out2d = pl.pallas_call(
        kernel,
        out_shape=jax.ShapeDtypeStruct((M_pad, E), out_dtype),
        grid_spec=pltpu.PrefetchScalarGridSpec(
            num_scalar_prefetch=0,
            grid=grid,
            in_specs=[
                pl.BlockSpec((tm, E), lambda i, j: (i, 0)),   # x row tile
                pl.BlockSpec((E, th), lambda i, j: (0, j)),   # W1 column tile
                pl.BlockSpec((1, th), lambda i, j: (0, j)),   # b1 tile
                pl.BlockSpec((th, E), lambda i, j: (j, 0)),   # W2 row tile
                pl.BlockSpec((1, E), lambda i, j: (0, 0)),    # b2 (full)
            ],
            out_specs=pl.BlockSpec((tm, E), lambda i, j: (i, 0)),
            scratch_shapes=[pltpu.VMEM((tm, E), jnp.float32)],
        ),
        compiler_params=pltpu.CompilerParams(
            dimension_semantics=("parallel", "arbitrary"),
            vmem_limit_bytes=vmem_limit),
        cost_estimate=cost,
    )(x2d, w1, b1_2d, w2, b2_2d)

    return out2d[:M].reshape(B, S, E)


def init_params(key, embed_dim):
    """Deterministic init mimicking nn.Linear's U(-1/sqrt(fan_in), 1/sqrt(fan_in))."""
    hidden = 4 * embed_dim
    k1, k2, k3, k4 = jax.random.split(key, 4)
    lim1 = 1.0 / jnp.sqrt(embed_dim)
    lim2 = 1.0 / jnp.sqrt(hidden)
    w1 = jax.random.uniform(k1, (embed_dim, hidden), jnp.float32, -lim1, lim1)
    b1 = jax.random.uniform(k2, (hidden,), jnp.float32, -lim1, lim1)
    w2 = jax.random.uniform(k3, (hidden, embed_dim), jnp.float32, -lim2, lim2)
    b2 = jax.random.uniform(k4, (embed_dim,), jnp.float32, -lim2, lim2)
    return w1, b1, w2, b2


def feed_forward_ref(x, w1, b1, w2, b2, *, activation="relu"):
    h = jnp.einsum("bse,eh->bsh", x, w1) + b1
    h = jnp.maximum(h, 0.0) if activation == "relu" else _gelu_tanh(h)
    return jnp.einsum("bsh,he->bse", h, w2) + b2


if __name__ == "__main__":
    key = jax.random.PRNGKey(0)
    k_x, k_p = jax.random.split(key)

    batch, seq, embed_dim = 2, 8, 32  # demo sizes; real configs use E % 128 == 0

    x = jax.random.normal(k_x, (batch, seq, embed_dim), jnp.float32)
    w1, b1, w2, b2 = init_params(k_p, embed_dim)

    ok = True
    for activation in ("relu", "gelu"):
        ref = feed_forward_ref(x, w1, b1, w2, b2, activation=activation)

        # Strict numerical check on the f32 compute path.
        out = feed_forward(x, w1, b1, w2, b2, activation=activation,
                           compute_dtype=jnp.float32)
        out = jax.block_until_ready(out)
        ok &= (out.shape == (batch, seq, embed_dim))
        ok &= bool(jnp.allclose(out, ref, atol=1e-4, rtol=1e-4))

        # Default (bf16-compute) fast path: looser tolerance, f32 accumulation.
        out_fast = feed_forward(x, w1, b1, w2, b2, activation=activation)
        out_fast = jax.block_until_ready(out_fast)
        ok &= (out_fast.shape == (batch, seq, embed_dim))
        ok &= bool(jnp.allclose(out_fast, ref, atol=5e-2, rtol=5e-2))

    assert ok
    print("KERNEL_OK")
</pallas_src>

<mosaic_0001>
module attributes {stable_mosaic.version = 11 : i64} {
  func.func @_ffn_kernel(%arg0: i32, %arg1: i32, %arg2: memref<16x32xf32, #tpu.memory_space<vmem>>, %arg3: memref<32x128xf32, #tpu.memory_space<vmem>>, %arg4: memref<1x128xf32, #tpu.memory_space<vmem>>, %arg5: memref<128x32xf32, #tpu.memory_space<vmem>>, %arg6: memref<1x32xf32, #tpu.memory_space<vmem>>, %arg7: memref<16x32xf32, #tpu.memory_space<vmem>>, %arg8: memref<16x32xf32, #tpu.memory_space<vmem>>) attributes {dimension_semantics = [#tpu.dimension_semantics<parallel>, #tpu.dimension_semantics<arbitrary>], iteration_bounds = array<i64: 1, 1>, scalar_prefetch = 0 : i64, scratch_operands = 1 : i64, tpu.core_type = #tpu.core_type<tc>, window_params = [{transform_indices = @transform_0, window_bounds = array<i64: 16, 32>}, {transform_indices = @transform_1, window_bounds = array<i64: 32, 128>}, {transform_indices = @transform_2, window_bounds = array<i64: 1, 128>}, {transform_indices = @transform_3, window_bounds = array<i64: 128, 32>}, {pipeline_mode = #tpu.pipeline_mode<synchronous>, transform_indices = @transform_4, window_bounds = array<i64: 1, 32>}, {transform_indices = @transform_5, window_bounds = array<i64: 16, 32>}]} {
    %c0_i32 = arith.constant 0 : i32
    %0 = arith.cmpi eq, %arg1, %c0_i32 : i32
    %1 = arith.extui %0 : i1 to i32
    %c0_i32_0 = arith.constant 0 : i32
    %2 = arith.cmpi ne, %1, %c0_i32_0 : i32
    scf.if %2 {
      %c0_16 = arith.constant 0 : index
      %c0_17 = arith.constant 0 : index
      %19 = vector.load %arg6[%c0_16, %c0_17] : memref<1x32xf32, #tpu.memory_space<vmem>>, vector<1x32xf32>
      %20 = vector.shape_cast %19 : vector<1x32xf32> to vector<1x32xf32>
      %21 = vector.broadcast %20 : vector<1x32xf32> to vector<16x32xf32>
      %c0_18 = arith.constant 0 : index
      %c0_19 = arith.constant 0 : index
      %22 = vector.load %arg8[%c0_18, %c0_19] : memref<16x32xf32, #tpu.memory_space<vmem>>, vector<16x32xf32>
      tpu.vector_store %arg8[%c0_18, %c0_19], %21 {strides = array<i32>} : memref<16x32xf32, #tpu.memory_space<vmem>>, vector<16x32xf32>,
    } else {
    }
    %c0 = arith.constant 0 : index
    %c0_1 = arith.constant 0 : index
    %3 = vector.load %arg2[%c0, %c0_1] : memref<16x32xf32, #tpu.memory_space<vmem>>, vector<16x32xf32>
    %c0_2 = arith.constant 0 : index
    %c0_3 = arith.constant 0 : index
    %4 = vector.load %arg3[%c0_2, %c0_3] : memref<32x128xf32, #tpu.memory_space<vmem>>, vector<32x128xf32>
    %cst = arith.constant dense<0.000000e+00> : vector<16x128xf32>
    %5 = tpu.matmul %3, %4, %cst {dimension_numbers = #tpu.dot_dimension_numbers<[1], [0], [0], [1], [0, 0, 1, 1], [], []>} : vector<16x32xf32>, vector<32x128xf32>, vector<16x128xf32> -> vector<16x128xf32>
    %c0_4 = arith.constant 0 : index
    %c0_5 = arith.constant 0 : index
    %6 = vector.load %arg4[%c0_4, %c0_5] : memref<1x128xf32, #tpu.memory_space<vmem>>, vector<1x128xf32>
    %7 = vector.broadcast %6 : vector<1x128xf32> to vector<16x128xf32>
    %8 = arith.addf %5, %7 : vector<16x128xf32>
    %cst_6 = arith.constant 0.000000e+00 : f32
    %9 = vector.broadcast %cst_6 : f32 to vector<16x128xf32>
    %10 = arith.maximumf %8, %9 : vector<16x128xf32>
    %c0_7 = arith.constant 0 : index
    %c0_8 = arith.constant 0 : index
    %11 = vector.load %arg8[%c0_7, %c0_8] : memref<16x32xf32, #tpu.memory_space<vmem>>, vector<16x32xf32>
    %c0_9 = arith.constant 0 : index
    %c0_10 = arith.constant 0 : index
    %12 = vector.load %arg5[%c0_9, %c0_10] : memref<128x32xf32, #tpu.memory_space<vmem>>, vector<128x32xf32>
    %cst_11 = arith.constant dense<0.000000e+00> : vector<16x32xf32>
    %13 = tpu.matmul %10, %12, %cst_11 {dimension_numbers = #tpu.dot_dimension_numbers<[1], [0], [0], [1], [0, 0, 1, 1], [], []>} : vector<16x128xf32>, vector<128x32xf32>, vector<16x32xf32> -> vector<16x32xf32>
    %14 = arith.addf %11, %13 : vector<16x32xf32>
    %c0_12 = arith.constant 0 : index
    %c0_13 = arith.constant 0 : index
    %15 = vector.load %arg8[%c0_12, %c0_13] : memref<16x32xf32, #tpu.memory_space<vmem>>, vector<16x32xf32>
    tpu.vector_store %arg8[%c0_12, %c0_13], %14 {strides = array<i32>} : memref<16x32xf32, #tpu.memory_space<vmem>>, vector<16x32xf32>,
    %c0_i32_14 = arith.constant 0 : i32
    %16 = arith.cmpi eq, %arg1, %c0_i32_14 : i32
    %17 = arith.extui %16 : i1 to i32
    %c0_i32_15 = arith.constant 0 : i32
    %18 = arith.cmpi ne, %17, %c0_i32_15 : i32
    scf.if %18 {
      %c0_16 = arith.constant 0 : index
      %c0_17 = arith.constant 0 : index
      %19 = vector.load %arg8[%c0_16, %c0_17] : memref<16x32xf32, #tpu.memory_space<vmem>>, vector<16x32xf32>
      %c0_18 = arith.constant 0 : index
      %c0_19 = arith.constant 0 : index
      %20 = vector.load %arg7[%c0_18, %c0_19] : memref<16x32xf32, #tpu.memory_space<vmem>>, vector<16x32xf32>
      tpu.vector_store %arg7[%c0_18, %c0_19], %19 {strides = array<i32>} : memref<16x32xf32, #tpu.memory_space<vmem>>, vector<16x32xf32>,
    } else {
    }
    return
  }
  func.func @transform_0(%arg0: i32, %arg1: i32) -> (i32, i32) {
    %c0_i32 = arith.constant 0 : i32
    %c0_i32_0 = arith.constant 0 : i32
    return %arg0, %c0_i32 : i32, i32
  }
  func.func @transform_1(%arg0: i32, %arg1: i32) -> (i32, i32) {
    %c0_i32 = arith.constant 0 : i32
    %c0_i32_0 = arith.constant 0 : i32
    return %c0_i32, %arg1 : i32, i32
  }
  func.func @transform_2(%arg0: i32, %arg1: i32) -> (i32, i32) {
    %c0_i32 = arith.constant 0 : i32
    %c0_i32_0 = arith.constant 0 : i32
    return %c0_i32, %arg1 : i32, i32
  }
  func.func @transform_3(%arg0: i32, %arg1: i32) -> (i32, i32) {
    %c0_i32 = arith.constant 0 : i32
    %c0_i32_0 = arith.constant 0 : i32
    return %arg1, %c0_i32 : i32, i32
  }
  func.func @transform_4(%arg0: i32, %arg1: i32) -> (i32, i32) {
    %c0_i32 = arith.constant 0 : i32
    %c0_i32_0 = arith.constant 0 : i32
    %c0_i32_1 = arith.constant 0 : i32
    return %c0_i32, %c0_i32_0 : i32, i32
  }
  func.func @transform_5(%arg0: i32, %arg1: i32) -> (i32, i32) {
    %c0_i32 = arith.constant 0 : i32
    %c0_i32_0 = arith.constant 0 : i32
    return %arg0, %c0_i32 : i32, i32
  }
}

</mosaic_0001>

<llo_original>
// kernel: tpu_custom_call.1
$region0: #{tpu_custom_call.1}
  #allocation0 [shape = 'u32[]', space=smem, size = 0x4, offset = 0x4, fixed_abs, tag = 'smem constant byte address 0x4 - core index']
  #allocation1 [shape = 'u32[72,128]{1,0:T(1,128)}', space=vmem, size = 0x9000, scoped, tag = 'internal scratch']
  #allocation2 [shape = 'f32[16,32]{1,0:T(8,128)}', space=vmem, size = 0x2000, scoped, tag = 'scratch operand']
  %s0 = inlined_call_operand.vmem [shape: f32[16,32], index: 0, kind: input, shape index: {}]
  %s1 = inlined_call_operand.vmem [shape: f32[32,128], index: 1, kind: input, shape index: {}]
  %s2 = inlined_call_operand.vmem [shape: f32[1,128], index: 2, kind: input, shape index: {}]
  %s3 = inlined_call_operand.vmem [shape: f32[128,32], index: 3, kind: input, shape index: {}]
  %s4 = inlined_call_operand.vmem [shape: f32[1,32], index: 4, kind: input, shape index: {}]
  %s5 = inlined_call_operand.hbm [shape: f32[16,32], index: 5, kind: output, shape index: {}]
  %s6 = sld [smem:[#allocation0]]
  $region38: #{tpu_custom_call.1} parent=0
    _
  %s8 = ssub.s32 1, %s6
  %s9 = scalar_select 0, %s8, %s6
  $region1: #{tpu_custom_call.1} parent=0
    #allocation3 [shape = 'u8[8192]{0}', space=vmem, size = 0x2000, scoped, tag = 'output window, operand 0, single buffered']
    #allocation4 [shape = 's32[1]{0}', space=sflag, size = 0x4, scoped, tag = 'scoped memory for tpu_custom_call.1']
    %10 = vsyncpa [#allocation4], 0
    // Predicated region
    $region2: #{tpu_custom_call.1} parent=1 // pred_check
      _
    $region3: #{tpu_custom_call.1} parent=1 // pred_check_branch
      %12 = sbr.rel (0) target = $region5
    $region4: #{tpu_custom_call.1} parent=1 // pred_region
      _
    $region5: #{tpu_custom_call.1} parent=1 // pred_fallthru
      _
    // Predicated region
    $region6: #{tpu_custom_call.1} parent=1 // pred_check
      _
    $region7: #{tpu_custom_call.1} parent=1 // pred_check_branch
      %14 = sbr.rel (0) target = $region9
    $region8: #{tpu_custom_call.1} parent=1 // pred_region
      _
    $region9: #{tpu_custom_call.1} parent=1 // pred_fallthru
      _
    // Predicated region
    $region10: #{tpu_custom_call.1} parent=1 // pred_check
      _
    $region11: #{tpu_custom_call.1} parent=1 // pred_check_branch
      %16 = sbr.rel (0) target = $region13
    $region12: #{tpu_custom_call.1} parent=1 // pred_region
      _
    $region13: #{tpu_custom_call.1} parent=1 // pred_fallthru
      _
    // Predicated region
    $region14: #{tpu_custom_call.1} parent=1 // pred_check
      _
    $region15: #{tpu_custom_call.1} parent=1 // pred_check_branch
      %18 = sbr.rel (0) target = $region17
    $region16: #{tpu_custom_call.1} parent=1 // pred_region
      _
    $region17: #{tpu_custom_call.1} parent=1 // pred_fallthru
      _
    // Predicated region
    $region18: #{tpu_custom_call.1} parent=1 // pred_check
      _
    $region19: #{tpu_custom_call.1} parent=1 // pred_check_branch
      %20 = sbr.rel (0) target = $region21
    $region20: #{tpu_custom_call.1} parent=1 // pred_region
      _
    $region21: #{tpu_custom_call.1} parent=1 // pred_fallthru
      _
    %p21 = scmp.eq.s32.totalorder 0, 0
    // Predicated region
    $region22: #{tpu_custom_call.1} parent=1 // pred_check
      %p22 = pneg %p21
    $region23: #{tpu_custom_call.1} parent=1 // pred_check_branch
      %24 = sbr.rel (%p22) target = $region25
    $region24: #{tpu_custom_call.1} parent=1 // pred_region
      %v25 = vld [vmem:[%s4] sm:$0x1]
      %v27 = vperm.slane %v25, 0
      %vm29 = vcmask 261120
      %30 = vst.msk [vmem:[#allocation2] sm:$0xff] %vm29, %v27
      %31 = vst.msk [vmem:[#allocation2 + $0x8] sm:$0xff] %vm29, %v27
    $region25: #{tpu_custom_call.1} parent=1 // pred_fallthru
      _
    %v32 = vld [vmem:[%s0] sm:$0xff]
    %v33 = vld [vmem:[%s0 + $0x8] sm:$0xff]
    %v34 = vld [vmem:[%s1] sm:$0xff]
    %v35 = vld [vmem:[%s1 + $0x8] sm:$0xff]
    %v36 = vld [vmem:[%s1 + $0x10] sm:$0xff]
    %v37 = vld [vmem:[%s1 + $0x18] sm:$0xff]
    %v38 = vld [vmem:[%s2] sm:$0x1]
    %v40 = vperm.slane %v38, 0
    %vm42 = vcmask 261120
    %v44 = vsel %vm42, %v32, 0
    %v47 = vsel %vm42, %v33, 0
    %49 = vmatpush.msra.mxu0 0.0
    %50 = vmatpush.msra.mxu0 0.0
    %51 = vmatpush.msra.mxu0 0.0
    %52 = vmatpush.msra.mxu0 0.0
    %53 = vmatpush.msra.mxu0 0.0
    %54 = vmatpush.msra.mxu0 0.0
    %55 = vmatpush.msra.mxu0 0.0
    %56 = vmatpush.msra.mxu0 0.0
    %57 = vmatpush.msra.mxu0 0.0
    %58 = vmatpush.msra.mxu0 0.0
    %59 = vmatpush.msra.mxu0 0.0
    %60 = vmatpush.msra.mxu0 0.0
    %61 = vmatpush.msra.mxu0 %v37
    %62 = vmatpush.msra.mxu0 %v36
    %63 = vmatpush.msra.mxu0 %v35
    %64 = vmatpush.msra.mxu0 %v34
    %65 = vmatmul.f32.gmra.mxu0 %v44
    %v66 = vpop.f32.mrf.mxu0
    %v67 = vadd.f32 %v40, %v66
    %68 = vmatmul.f32.gmra.mxu0 %v47
    %v69 = vpop.f32.mrf.mxu0
    %v70 = vadd.f32 %v40, %v69
    %71 = vdwg.mxu0
    %v72 = vmax.f32 %v67, 0.0
    %v73 = vmax.f32 %v70, 0.0
    %v74 = vld [vmem:[#allocation2] sm:$0xff]
    %v75 = vld [vmem:[#allocation2 + $0x8] sm:$0xff]
    %v76 = vld [vmem:[%s3] sm:$0xff]
    %v77 = vld [vmem:[%s3 + $0x8] sm:$0xff]
    %v78 = vld [vmem:[%s3 + $0x10] sm:$0xff]
    %v79 = vld [vmem:[%s3 + $0x18] sm:$0xff]
    %v80 = vld [vmem:[%s3 + $0x20] sm:$0xff]
    %v81 = vld [vmem:[%s3 + $0x28] sm:$0xff]
    %v82 = vld [vmem:[%s3 + $0x30] sm:$0xff]
    %v83 = vld [vmem:[%s3 + $0x38] sm:$0xff]
    %v84 = vld [vmem:[%s3 + $0x40] sm:$0xff]
    %v85 = vld [vmem:[%s3 + $0x48] sm:$0xff]
    %v86 = vld [vmem:[%s3 + $0x50] sm:$0xff]
    %v87 = vld [vmem:[%s3 + $0x58] sm:$0xff]
    %v88 = vld [vmem:[%s3 + $0x60] sm:$0xff]
    %v89 = vld [vmem:[%s3 + $0x68] sm:$0xff]
    %v90 = vld [vmem:[%s3 + $0x70] sm:$0xff]
    %v91 = vld [vmem:[%s3 + $0x78] sm:$0xff]
    %92 = vmatpush.msra.mxu0 %v91
    %93 = vmatpush.msra.mxu0 %v90
    %94 = vmatpush.msra.mxu0 %v89
    %95 = vmatpush.msra.mxu0 %v88
    %96 = vmatpush.msra.mxu0 %v87
    %97 = vmatpush.msra.mxu0 %v86
    %98 = vmatpush.msra.mxu0 %v85
    %99 = vmatpush.msra.mxu0 %v84
    %100 = vmatpush.msra.mxu0 %v83
    %101 = vmatpush.msra.mxu0 %v82
    %102 = vmatpush.msra.mxu0 %v81
    %103 = vmatpush.msra.mxu0 %v80
    %104 = vmatpush.msra.mxu0 %v79
    %105 = vmatpush.msra.mxu0 %v78
    %106 = vmatpush.msra.mxu0 %v77
    %107 = vmatpush.msra.mxu0 %v76
    %108 = vmatmul.f32.gmra.mxu0 %v72
    %v109 = vpop.f32.mrf.mxu0
    %v110 = vadd.f32 0.0, %v109
    %111 = vmatmul.f32.gmra.mxu0 %v73
    %v112 = vpop.f32.mrf.mxu0
    %v113 = vadd.f32 0.0, %v112
    %114 = vdwg.mxu0
    %v115 = vadd.f32 %v74, %v110
    %v116 = vadd.f32 %v75, %v113
    %117 = vst.msk [vmem:[#allocation2] sm:$0xff] %vm42, %v115
    %118 = vst.msk [vmem:[#allocation2 + $0x8] sm:$0xff] %vm42, %v116
    // Predicated region
    $region26: #{tpu_custom_call.1} parent=1 // pred_check
      %p119 = pneg %p21
    $region27: #{tpu_custom_call.1} parent=1 // pred_check_branch
      %121 = sbr.rel (%p119) target = $region29
    $region28: #{tpu_custom_call.1} parent=1 // pred_region
      %v122 = vld [vmem:[#allocation2] sm:$0xff]
      %v123 = vld [vmem:[#allocation2 + $0x8] sm:$0xff]
      %124 = vst.msk [vmem:[#allocation3] sm:$0xff] %vm42, %v122
      %125 = vst.msk [vmem:[#allocation3 + $0x8] sm:$0xff] %vm42, %v123
    $region29: #{tpu_custom_call.1} parent=1 // pred_fallthru
      _
    // Predicated region
    $region30: #{tpu_custom_call.1} parent=1 // pred_check
      _
    $region31: #{tpu_custom_call.1} parent=1 // pred_check_branch
      %127 = sbr.rel (0) target = $region33
    $region32: #{tpu_custom_call.1} parent=1 // pred_region
      %129 = vsyncadd [#allocation4], 0
      %s130 = sshll.u32 [#allocation3], 4
      %s131 = int_to_ptr.vmem [resolvable:$true] %s130
      %s132 = sshll.u32 %s5, 4
      %s133 = int_to_ptr.hbm [resolvable:$true] %s132
      %138 = dma.vmem_to_hbm [thread:$0]  %s131, 256, %s133, [#allocation4], 128, 128, 8
    $region33: #{tpu_custom_call.1} parent=1 // pred_fallthru
      _
    // Predicated region
    $region34: #{tpu_custom_call.1} parent=1 // pred_check
      _
    $region35: #{tpu_custom_call.1} parent=1 // pred_check_branch
      %140 = sbr.rel (0) target = $region37
    $region36: #{tpu_custom_call.1} parent=1 // pred_region
      %142 = dma.done [#allocation4], 256
    $region37: #{tpu_custom_call.1} parent=1 // pred_fallthru
      _
    %143 = vsyncpa [#allocation4], 1

</llo_original>
